<compile_context>
chip_gen: v7x
topology: tpu7x:2x2x1
jax: 0.10.0
libtpu: 0.0.40
codegen_flags: <defaults>
</compile_context>

<pallas_src>
from functools import partial

import jax
import jax.numpy as jnp
from jax.experimental import pallas as pl
from jax.experimental.pallas import tpu as pltpu

LANE = 128
SUBLANE = 8


def _round_up(x, m):
    return (x + m - 1) // m * m


def _pad2d(a, rows, cols):
    r, c = a.shape
    return jnp.pad(a, ((0, rows - r), (0, cols - c)))


# ----------------------------------------------------------------------------
# Kernel: fused  xv  = fv @ Wp + bp                        (proj)
#                o   = silu(xv @ W1 + b1) @ W2 + b2        (heads[head], MLPHead)
#                ixv = silu(o  @ W3 + b3) @ W4 + b4        (invheads[head])
# ----------------------------------------------------------------------------
def multitask_head_kernel(head_idx_ref,                       # scalar prefetch
                          fv_ref, wp_ref, bp_ref,
                          w1_ref, b1_ref, w2_ref, b2_ref,
                          w3_ref, b3_ref, w4_ref, b4_ref,
                          o_ref, xv_ref, ixv_ref):
    del head_idx_ref  # consumed by the index_maps (head selection), not here

    # Hoisted bias reads; biases stay fp32, accumulation is fp32.
    bp = bp_ref[...]
    b1 = b1_ref[...]
    b2 = b2_ref[...]
    b3 = b3_ref[...]
    b4 = b4_ref[...]

    fv = fv_ref[...].astype(wp_ref.dtype)

    # proj
    xv = jnp.dot(fv, wp_ref[...], preferred_element_type=jnp.float32) + bp
    xv_ref[...] = xv.astype(xv_ref.dtype)

    # head MLP (SiLU in fp32 -> v5e-safe, EUP sigmoid overlaps with MXU work)
    h = jnp.dot(xv.astype(w1_ref.dtype), w1_ref[...],
                preferred_element_type=jnp.float32) + b1
    h = h * jax.nn.sigmoid(h)
    o = jnp.dot(h.astype(w2_ref.dtype), w2_ref[...],
                preferred_element_type=jnp.float32) + b2
    o_ref[...] = o.astype(o_ref.dtype)

    # inverse head MLP
    g = jnp.dot(o.astype(w3_ref.dtype), w3_ref[...],
                preferred_element_type=jnp.float32) + b3
    g = g * jax.nn.sigmoid(g)
    ixv = jnp.dot(g.astype(w4_ref.dtype), w4_ref[...],
                  preferred_element_type=jnp.float32) + b4
    ixv_ref[...] = ixv.astype(ixv_ref.dtype)


# ----------------------------------------------------------------------------
# Parameter init (mimics torch.nn.Linear: uniform +-1/sqrt(fan_in)),
# MLPHead hidden size d_hid = round((d_in + d_out) * 1.5).
# ----------------------------------------------------------------------------
def _linear_init(key, d_in, d_out):
    kw, kb = jax.random.split(key)
    lim = 1.0 / (d_in ** 0.5)
    w = jax.random.uniform(kw, (d_in, d_out), jnp.float32, -lim, lim)
    b = jax.random.uniform(kb, (d_out,), jnp.float32, -lim, lim)
    return w, b


def _mlp_head_init(key, d_in, d_out):
    d_hid = round((d_in + d_out) * 1.5)
    k1, k2 = jax.random.split(key)
    w1, b1 = _linear_init(k1, d_in, d_hid)
    w2, b2 = _linear_init(k2, d_hid, d_out)
    return {"w1": w1, "b1": b1, "w2": w2, "b2": b2}


def init_multitask_params(key, d_backbone, d_x, head_dims):
    names = list(head_dims)
    keys = jax.random.split(key, 1 + 2 * len(names))
    w, b = _linear_init(keys[0], d_backbone, d_x)
    params = {"proj": {"w": w, "b": b}, "heads": {}, "invheads": {}}
    for i, name in enumerate(names):
        params["heads"][name] = _mlp_head_init(keys[1 + 2 * i], d_x, head_dims[name])
        params["invheads"][name] = _mlp_head_init(keys[2 + 2 * i], head_dims[name], d_x)
    return params


# ----------------------------------------------------------------------------
# Pack all heads into lane-padded per-head stacks (done once, outside the call).
# Weights may be cast to bf16; biases stay fp32.
# ----------------------------------------------------------------------------
def pack_multitask_params(params, head_dims, param_dtype=jnp.float32):
    names = list(head_dims)
    d_backbone, d_x = params["proj"]["w"].shape
    hid_all = [params["heads"][n]["w1"].shape[1] for n in names] + \
              [params["invheads"][n]["w1"].shape[1] for n in names]

    df_p = _round_up(d_backbone, LANE)
    dx_p = _round_up(d_x, LANE)
    dh_p = _round_up(max(hid_all), LANE)
    do_p = _round_up(max(head_dims.values()), LANE)

    def stack(mats, rows, cols, dtype):
        return jnp.stack([_pad2d(m, rows, cols) for m in mats]).astype(dtype)

    heads = [params["heads"][n] for n in names]
    inv = [params["invheads"][n] for n in names]
    return {
        "head_names": names,
        "head_dims": dict(head_dims),
        "dims": dict(d_backbone=d_backbone, d_x=d_x,
                     df_p=df_p, dx_p=dx_p, dh_p=dh_p, do_p=do_p),
        "wp": _pad2d(params["proj"]["w"], df_p, dx_p).astype(param_dtype),
        "bp": _pad2d(params["proj"]["b"][None, :], 1, dx_p),
        "w1": stack([h["w1"] for h in heads], dx_p, dh_p, param_dtype),
        "b1": stack([h["b1"][None, :] for h in heads], 1, dh_p, jnp.float32),
        "w2": stack([h["w2"] for h in heads], dh_p, do_p, param_dtype),
        "b2": stack([h["b2"][None, :] for h in heads], 1, do_p, jnp.float32),
        "w3": stack([h["w1"] for h in inv], do_p, dh_p, param_dtype),
        "b3": stack([h["b1"][None, :] for h in inv], 1, dh_p, jnp.float32),
        "w4": stack([h["w2"] for h in inv], dh_p, dx_p, param_dtype),
        "b4": stack([h["b2"][None, :] for h in inv], 1, dx_p, jnp.float32),
    }


# ----------------------------------------------------------------------------
# Jitted fused forward on padded shapes (head index is data, not static, so
# one executable serves every head name).
# ----------------------------------------------------------------------------
@partial(jax.jit, static_argnames=("tb", "dims"))
def _fused_forward(head_idx, fv,
                   wp, bp, w1, b1, w2, b2, w3, b3, w4, b4,
                   *, tb, dims):
    df_p, dx_p, dh_p, do_p = dims
    b, d_backbone = fv.shape
    n_tiles = pl.cdiv(b, tb)
    b_pad = n_tiles * tb
    fv_p = jnp.pad(fv, ((0, b_pad - b), (0, df_p - d_backbone)))
    out_dtype = fv.dtype

    wbytes = jnp.dtype(wp.dtype).itemsize
    w_elems = df_p * dx_p + dx_p * dh_p + dh_p * do_p + do_p * dh_p + dh_p * dx_p
    cost = pl.CostEstimate(
        flops=2 * b_pad * w_elems,
        transcendentals=2 * b_pad * dh_p,
        bytes_accessed=(4 * b_pad * df_p
                        + wbytes * w_elems
                        + 4 * (2 * dx_p + 2 * dh_p + do_p)
                        + 4 * b_pad * (do_p + 2 * dx_p)),
    )

    # index_maps receive (grid idx..., *scalar_prefetch_refs)
    row_spec = lambda cols: pl.BlockSpec((tb, cols), lambda i, hidx: (i, 0))
    full2d = lambda shape: pl.BlockSpec(shape, lambda i, hidx: (0, 0))
    head_spec = lambda rows, cols: pl.BlockSpec(
        (None, rows, cols), lambda i, hidx: (hidx[0], 0, 0))

    return pl.pallas_call(
        multitask_head_kernel,
        out_shape=(jax.ShapeDtypeStruct((b_pad, do_p), out_dtype),
                   jax.ShapeDtypeStruct((b_pad, dx_p), out_dtype),
                   jax.ShapeDtypeStruct((b_pad, dx_p), out_dtype)),
        grid_spec=pltpu.PrefetchScalarGridSpec(
            num_scalar_prefetch=1,
            grid=(n_tiles,),
            in_specs=[
                row_spec(df_p),            # fv tile
                full2d((df_p, dx_p)),      # Wp (VMEM-resident across tiles)
                full2d((1, dx_p)),         # bp
                head_spec(dx_p, dh_p),     # W1[head]
                head_spec(1, dh_p),        # b1[head]
                head_spec(dh_p, do_p),     # W2[head]
                head_spec(1, do_p),        # b2[head]
                head_spec(do_p, dh_p),     # W3[head]
                head_spec(1, dh_p),        # b3[head]
                head_spec(dh_p, dx_p),     # W4[head]
                head_spec(1, dx_p),        # b4[head]
            ],
            out_specs=[row_spec(do_p), row_spec(dx_p), row_spec(dx_p)],
        ),
        compiler_params=pltpu.CompilerParams(
            dimension_semantics=("parallel",)),   # v7x: 2 TCs split the batch
        cost_estimate=cost,
    )(head_idx, fv_p, wp, bp, w1, b1, w2, b2, w3, b3, w4, b4)


# ----------------------------------------------------------------------------
# Wrapper: forward(fv, head) -> (o, xv, ixv)   (same semantics as the module)
# ----------------------------------------------------------------------------
def multitask_forward(fv, packed, head, *, tile_rows=256):
    names = packed["head_names"]
    head_idx = jnp.asarray([names.index(head)], dtype=jnp.int32)
    d = packed["dims"]
    dims = (d["df_p"], d["dx_p"], d["dh_p"], d["do_p"])

    b, d_backbone = fv.shape
    assert d_backbone == d["d_backbone"]
    tb = min(_round_up(tile_rows, SUBLANE), _round_up(b, SUBLANE))

    o_p, xv_p, ixv_p = _fused_forward(
        head_idx, fv,
        packed["wp"], packed["bp"],
        packed["w1"], packed["b1"], packed["w2"], packed["b2"],
        packed["w3"], packed["b3"], packed["w4"], packed["b4"],
        tb=tb, dims=dims)

    d_out = packed["head_dims"][head]
    d_x = d["d_x"]
    return o_p[:b, :d_out], xv_p[:b, :d_x], ixv_p[:b, :d_x]


# ----------------------------------------------------------------------------
# Pure-JAX reference (same math as the torch module, unpadded weights)
# ----------------------------------------------------------------------------
def _silu(x):
    return x * jax.nn.sigmoid(x)


def reference_forward(fv, params, head):
    xv = fv @ params["proj"]["w"] + params["proj"]["b"]
    h = params["heads"][head]
    ih = params["invheads"][head]
    o = _silu(xv @ h["w1"] + h["b1"]) @ h["w2"] + h["b2"]
    ixv = _silu(o @ ih["w1"] + ih["b1"]) @ ih["w2"] + ih["b2"]
    return o, xv, ixv


if __name__ == "__main__":
    HEAD_DIMS = {"classify": 16, "attributes": 10, "embed": 24}
    batch, d_backbone, d_x = 8, 64, 32

    key = jax.random.PRNGKey(0)
    kf, kp = jax.random.split(key)
    # Stand-in for fv = backbone(x); see TODO(synk) above.
    fv = jax.random.normal(kf, (batch, d_backbone), jnp.float32)
    params = init_multitask_params(kp, d_backbone, d_x, HEAD_DIMS)

    # fp32 weights: strict correctness check.
    packed32 = pack_multitask_params(params, HEAD_DIMS, param_dtype=jnp.float32)
    o, xv, ixv = multitask_forward(fv, packed32, "classify")
    jax.block_until_ready((o, xv, ixv))
    o_r, xv_r, ixv_r = reference_forward(fv, params, "classify")
    assert o.shape == (batch, HEAD_DIMS["classify"])
    assert xv.shape == (batch, d_x) and ixv.shape == (batch, d_x)
    assert jnp.allclose(o, o_r, atol=1e-4, rtol=1e-4)
    assert jnp.allclose(xv, xv_r, atol=1e-4, rtol=1e-4)
    assert jnp.allclose(ixv, ixv_r, atol=1e-4, rtol=1e-4)

    # Same packed params, different head: exercises the scalar-prefetch head
    # selection and reuses the SAME jitted executable (head index is data).
    o3, xv3, ixv3 = multitask_forward(fv, packed32, "attributes")
    jax.block_until_ready((o3, xv3, ixv3))
    o3_r, xv3_r, ixv3_r = reference_forward(fv, params, "attributes")
    assert o3.shape == (batch, HEAD_DIMS["attributes"])
    assert jnp.allclose(o3, o3_r, atol=1e-4, rtol=1e-4)
    assert jnp.allclose(xv3, xv3_r, atol=1e-4, rtol=1e-4)
    assert jnp.allclose(ixv3, ixv3_r, atol=1e-4, rtol=1e-4)

    # bf16 matmul operands (v6e/v7x MXU path). Loose tolerance vs fp32 ref.
    packed16 = pack_multitask_params(params, HEAD_DIMS, param_dtype=jnp.bfloat16)
    o2, xv2, ixv2 = multitask_forward(fv, packed16, "embed")
    jax.block_until_ready((o2, xv2, ixv2))
    o2_r, xv2_r, ixv2_r = reference_forward(fv, params, "embed")
    assert o2.shape == (batch, HEAD_DIMS["embed"])
    assert jnp.allclose(o2, o2_r, atol=2e-1, rtol=1e-1)
    assert jnp.allclose(xv2, xv2_r, atol=2e-1, rtol=1e-1)
    assert jnp.allclose(ixv2, ixv2_r, atol=2e-1, rtol=1e-1)

    print("KERNEL_OK")
</pallas_src>

<mosaic_0001>
module attributes {stable_mosaic.version = 11 : i64} {
  func.func @multitask_head_kernel(%arg0: i32, %arg1: memref<1xi32, #tpu.memory_space<smem>>, %arg2: memref<8x128xf32, #tpu.memory_space<vmem>>, %arg3: memref<128x128xf32, #tpu.memory_space<vmem>>, %arg4: memref<1x128xf32, #tpu.memory_space<vmem>>, %arg5: memref<1x128x128xf32, #tpu.memory_space<vmem>>, %arg6: memref<1x1x128xf32, #tpu.memory_space<vmem>>, %arg7: memref<1x128x128xf32, #tpu.memory_space<vmem>>, %arg8: memref<1x1x128xf32, #tpu.memory_space<vmem>>, %arg9: memref<1x128x128xf32, #tpu.memory_space<vmem>>, %arg10: memref<1x1x128xf32, #tpu.memory_space<vmem>>, %arg11: memref<1x128x128xf32, #tpu.memory_space<vmem>>, %arg12: memref<1x1x128xf32, #tpu.memory_space<vmem>>, %arg13: memref<8x128xf32, #tpu.memory_space<vmem>>, %arg14: memref<8x128xf32, #tpu.memory_space<vmem>>, %arg15: memref<8x128xf32, #tpu.memory_space<vmem>>) attributes {dimension_semantics = [#tpu.dimension_semantics<parallel>], iteration_bounds = array<i64: 1>, scalar_prefetch = 1 : i64, scratch_operands = 0 : i64, tpu.core_type = #tpu.core_type<tc>, window_params = [{transform_indices = @transform_0, window_bounds = array<i64: 8, 128>}, {pipeline_mode = #tpu.pipeline_mode<synchronous>, transform_indices = @transform_1, window_bounds = array<i64: 128, 128>}, {pipeline_mode = #tpu.pipeline_mode<synchronous>, transform_indices = @transform_2, window_bounds = array<i64: 1, 128>}, {transform_indices = @transform_3, window_bounds = array<i64: 1, 128, 128>}, {transform_indices = @transform_4, window_bounds = array<i64: 1, 1, 128>}, {transform_indices = @transform_5, window_bounds = array<i64: 1, 128, 128>}, {transform_indices = @transform_6, window_bounds = array<i64: 1, 1, 128>}, {transform_indices = @transform_7, window_bounds = array<i64: 1, 128, 128>}, {transform_indices = @transform_8, window_bounds = array<i64: 1, 1, 128>}, {transform_indices = @transform_9, window_bounds = array<i64: 1, 128, 128>}, {transform_indices = @transform_10, window_bounds = array<i64: 1, 1, 128>}, {transform_indices = @transform_11, window_bounds = array<i64: 8, 128>}, {transform_indices = @transform_12, window_bounds = array<i64: 8, 128>}, {transform_indices = @transform_13, window_bounds = array<i64: 8, 128>}]} {
    %c0 = arith.constant 0 : index
    %c0_0 = arith.constant 0 : index
    %0 = vector.load %arg4[%c0, %c0_0] : memref<1x128xf32, #tpu.memory_space<vmem>>, vector<1x128xf32>
    %c0_1 = arith.constant 0 : index
    %c0_2 = arith.constant 0 : index
    %c0_3 = arith.constant 0 : index
    %1 = vector.load %arg6[%c0_1, %c0_2, %c0_3] : memref<1x1x128xf32, #tpu.memory_space<vmem>>, vector<1x1x128xf32>
    %2 = vector.shape_cast %1 : vector<1x1x128xf32> to vector<1x128xf32>
    %c0_4 = arith.constant 0 : index
    %c0_5 = arith.constant 0 : index
    %c0_6 = arith.constant 0 : index
    %3 = vector.load %arg8[%c0_4, %c0_5, %c0_6] : memref<1x1x128xf32, #tpu.memory_space<vmem>>, vector<1x1x128xf32>
    %4 = vector.shape_cast %3 : vector<1x1x128xf32> to vector<1x128xf32>
    %c0_7 = arith.constant 0 : index
    %c0_8 = arith.constant 0 : index
    %c0_9 = arith.constant 0 : index
    %5 = vector.load %arg10[%c0_7, %c0_8, %c0_9] : memref<1x1x128xf32, #tpu.memory_space<vmem>>, vector<1x1x128xf32>
    %6 = vector.shape_cast %5 : vector<1x1x128xf32> to vector<1x128xf32>
    %c0_10 = arith.constant 0 : index
    %c0_11 = arith.constant 0 : index
    %c0_12 = arith.constant 0 : index
    %7 = vector.load %arg12[%c0_10, %c0_11, %c0_12] : memref<1x1x128xf32, #tpu.memory_space<vmem>>, vector<1x1x128xf32>
    %8 = vector.shape_cast %7 : vector<1x1x128xf32> to vector<1x128xf32>
    %c0_13 = arith.constant 0 : index
    %c0_14 = arith.constant 0 : index
    %9 = vector.load %arg2[%c0_13, %c0_14] : memref<8x128xf32, #tpu.memory_space<vmem>>, vector<8x128xf32>
    %c0_15 = arith.constant 0 : index
    %c0_16 = arith.constant 0 : index
    %10 = vector.load %arg3[%c0_15, %c0_16] : memref<128x128xf32, #tpu.memory_space<vmem>>, vector<128x128xf32>
    %cst = arith.constant dense<0.000000e+00> : vector<8x128xf32>
    %11 = tpu.matmul %9, %10, %cst {dimension_numbers = #tpu.dot_dimension_numbers<[1], [0], [0], [1], [0, 0, 1, 1], [], []>} : vector<8x128xf32>, vector<128x128xf32>, vector<8x128xf32> -> vector<8x128xf32>
    %12 = vector.broadcast %0 : vector<1x128xf32> to vector<8x128xf32>
    %13 = arith.addf %11, %12 : vector<8x128xf32>
    %c0_17 = arith.constant 0 : index
    %c0_18 = arith.constant 0 : index
    %14 = vector.load %arg14[%c0_17, %c0_18] : memref<8x128xf32, #tpu.memory_space<vmem>>, vector<8x128xf32>
    tpu.vector_store %arg14[%c0_17, %c0_18], %13 {strides = array<i32>} : memref<8x128xf32, #tpu.memory_space<vmem>>, vector<8x128xf32>,
    %c0_19 = arith.constant 0 : index
    %c0_20 = arith.constant 0 : index
    %c0_21 = arith.constant 0 : index
    %15 = vector.load %arg5[%c0_19, %c0_20, %c0_21] : memref<1x128x128xf32, #tpu.memory_space<vmem>>, vector<1x128x128xf32>
    %16 = vector.shape_cast %15 : vector<1x128x128xf32> to vector<128x128xf32>
    %cst_22 = arith.constant dense<0.000000e+00> : vector<8x128xf32>
    %17 = tpu.matmul %13, %16, %cst_22 {dimension_numbers = #tpu.dot_dimension_numbers<[1], [0], [0], [1], [0, 0, 1, 1], [], []>} : vector<8x128xf32>, vector<128x128xf32>, vector<8x128xf32> -> vector<8x128xf32>
    %18 = vector.broadcast %2 : vector<1x128xf32> to vector<8x128xf32>
    %19 = arith.addf %17, %18 : vector<8x128xf32>
    %20 = arith.negf %19 : vector<8x128xf32>
    %21 = math.exp %20 : vector<8x128xf32>
    %cst_23 = arith.constant 1.000000e+00 : f32
    %22 = vector.broadcast %cst_23 : f32 to vector<8x128xf32>
    %23 = arith.addf %22, %21 : vector<8x128xf32>
    %24 = arith.divf %22, %23 : vector<8x128xf32>
    %25 = arith.mulf %19, %24 : vector<8x128xf32>
    %c0_24 = arith.constant 0 : index
    %c0_25 = arith.constant 0 : index
    %c0_26 = arith.constant 0 : index
    %26 = vector.load %arg7[%c0_24, %c0_25, %c0_26] : memref<1x128x128xf32, #tpu.memory_space<vmem>>, vector<1x128x128xf32>
    %27 = vector.shape_cast %26 : vector<1x128x128xf32> to vector<128x128xf32>
    %cst_27 = arith.constant dense<0.000000e+00> : vector<8x128xf32>
    %28 = tpu.matmul %25, %27, %cst_27 {dimension_numbers = #tpu.dot_dimension_numbers<[1], [0], [0], [1], [0, 0, 1, 1], [], []>} : vector<8x128xf32>, vector<128x128xf32>, vector<8x128xf32> -> vector<8x128xf32>
    %29 = vector.broadcast %4 : vector<1x128xf32> to vector<8x128xf32>
    %30 = arith.addf %28, %29 : vector<8x128xf32>
    %c0_28 = arith.constant 0 : index
    %c0_29 = arith.constant 0 : index
    %31 = vector.load %arg13[%c0_28, %c0_29] : memref<8x128xf32, #tpu.memory_space<vmem>>, vector<8x128xf32>
    tpu.vector_store %arg13[%c0_28, %c0_29], %30 {strides = array<i32>} : memref<8x128xf32, #tpu.memory_space<vmem>>, vector<8x128xf32>,
    %c0_30 = arith.constant 0 : index
    %c0_31 = arith.constant 0 : index
    %c0_32 = arith.constant 0 : index
    %32 = vector.load %arg9[%c0_30, %c0_31, %c0_32] : memref<1x128x128xf32, #tpu.memory_space<vmem>>, vector<1x128x128xf32>
    %33 = vector.shape_cast %32 : vector<1x128x128xf32> to vector<128x128xf32>
    %cst_33 = arith.constant dense<0.000000e+00> : vector<8x128xf32>
    %34 = tpu.matmul %30, %33, %cst_33 {dimension_numbers = #tpu.dot_dimension_numbers<[1], [0], [0], [1], [0, 0, 1, 1], [], []>} : vector<8x128xf32>, vector<128x128xf32>, vector<8x128xf32> -> vector<8x128xf32>
    %35 = vector.broadcast %6 : vector<1x128xf32> to vector<8x128xf32>
    %36 = arith.addf %34, %35 : vector<8x128xf32>
    %37 = arith.negf %36 : vector<8x128xf32>
    %38 = math.exp %37 : vector<8x128xf32>
    %cst_34 = arith.constant 1.000000e+00 : f32
    %39 = vector.broadcast %cst_34 : f32 to vector<8x128xf32>
    %40 = arith.addf %39, %38 : vector<8x128xf32>
    %41 = arith.divf %39, %40 : vector<8x128xf32>
    %42 = arith.mulf %36, %41 : vector<8x128xf32>
    %c0_35 = arith.constant 0 : index
    %c0_36 = arith.constant 0 : index
    %c0_37 = arith.constant 0 : index
    %43 = vector.load %arg11[%c0_35, %c0_36, %c0_37] : memref<1x128x128xf32, #tpu.memory_space<vmem>>, vector<1x128x128xf32>
    %44 = vector.shape_cast %43 : vector<1x128x128xf32> to vector<128x128xf32>
    %cst_38 = arith.constant dense<0.000000e+00> : vector<8x128xf32>
    %45 = tpu.matmul %42, %44, %cst_38 {dimension_numbers = #tpu.dot_dimension_numbers<[1], [0], [0], [1], [0, 0, 1, 1], [], []>} : vector<8x128xf32>, vector<128x128xf32>, vector<8x128xf32> -> vector<8x128xf32>
    %46 = vector.broadcast %8 : vector<1x128xf32> to vector<8x128xf32>
    %47 = arith.addf %45, %46 : vector<8x128xf32>
    %c0_39 = arith.constant 0 : index
    %c0_40 = arith.constant 0 : index
    %48 = vector.load %arg15[%c0_39, %c0_40] : memref<8x128xf32, #tpu.memory_space<vmem>>, vector<8x128xf32>
    tpu.vector_store %arg15[%c0_39, %c0_40], %47 {strides = array<i32>} : memref<8x128xf32, #tpu.memory_space<vmem>>, vector<8x128xf32>,
    return
  }
  func.func @transform_0(%arg0: i32, %arg1: memref<1xi32, #tpu.memory_space<smem>>) -> (i32, i32) {
    %c0_i32 = arith.constant 0 : i32
    %c0_i32_0 = arith.constant 0 : i32
    return %arg0, %c0_i32 : i32, i32
  }
  func.func @transform_1(%arg0: i32, %arg1: memref<1xi32, #tpu.memory_space<smem>>) -> (i32, i32) {
    %c0_i32 = arith.constant 0 : i32
    %c0_i32_0 = arith.constant 0 : i32
    %c0_i32_1 = arith.constant 0 : i32
    return %c0_i32, %c0_i32_0 : i32, i32
  }
  func.func @transform_2(%arg0: i32, %arg1: memref<1xi32, #tpu.memory_space<smem>>) -> (i32, i32) {
    %c0_i32 = arith.constant 0 : i32
    %c0_i32_0 = arith.constant 0 : i32
    %c0_i32_1 = arith.constant 0 : i32
    return %c0_i32, %c0_i32_0 : i32, i32
  }
  func.func @transform_3(%arg0: i32, %arg1: memref<1xi32, #tpu.memory_space<smem>>) -> (i32, i32, i32) {
    %c0 = arith.constant 0 : index
    %0 = memref.load %arg1[%c0] : memref<1xi32, #tpu.memory_space<smem>>
    %c0_i32 = arith.constant 0 : i32
    %c0_i32_0 = arith.constant 0 : i32
    %c0_i32_1 = arith.constant 0 : i32
    return %0, %c0_i32, %c0_i32_0 : i32, i32, i32
  }
  func.func @transform_4(%arg0: i32, %arg1: memref<1xi32, #tpu.memory_space<smem>>) -> (i32, i32, i32) {
    %c0 = arith.constant 0 : index
    %0 = memref.load %arg1[%c0] : memref<1xi32, #tpu.memory_space<smem>>
    %c0_i32 = arith.constant 0 : i32
    %c0_i32_0 = arith.constant 0 : i32
    %c0_i32_1 = arith.constant 0 : i32
    return %0, %c0_i32, %c0_i32_0 : i32, i32, i32
  }
  func.func @transform_5(%arg0: i32, %arg1: memref<1xi32, #tpu.memory_space<smem>>) -> (i32, i32, i32) {
    %c0 = arith.constant 0 : index
    %0 = memref.load %arg1[%c0] : memref<1xi32, #tpu.memory_space<smem>>
    %c0_i32 = arith.constant 0 : i32
    %c0_i32_0 = arith.constant 0 : i32
    %c0_i32_1 = arith.constant 0 : i32
    return %0, %c0_i32, %c0_i32_0 : i32, i32, i32
  }
  func.func @transform_6(%arg0: i32, %arg1: memref<1xi32, #tpu.memory_space<smem>>) -> (i32, i32, i32) {
    %c0 = arith.constant 0 : index
    %0 = memref.load %arg1[%c0] : memref<1xi32, #tpu.memory_space<smem>>
    %c0_i32 = arith.constant 0 : i32
    %c0_i32_0 = arith.constant 0 : i32
    %c0_i32_1 = arith.constant 0 : i32
    return %0, %c0_i32, %c0_i32_0 : i32, i32, i32
  }
  func.func @transform_7(%arg0: i32, %arg1: memref<1xi32, #tpu.memory_space<smem>>) -> (i32, i32, i32) {
    %c0 = arith.constant 0 : index
    %0 = memref.load %arg1[%c0] : memref<1xi32, #tpu.memory_space<smem>>
    %c0_i32 = arith.constant 0 : i32
    %c0_i32_0 = arith.constant 0 : i32
    %c0_i32_1 = arith.constant 0 : i32
    return %0, %c0_i32, %c0_i32_0 : i32, i32, i32
  }
  func.func @transform_8(%arg0: i32, %arg1: memref<1xi32, #tpu.memory_space<smem>>) -> (i32, i32, i32) {
    %c0 = arith.constant 0 : index
    %0 = memref.load %arg1[%c0] : memref<1xi32, #tpu.memory_space<smem>>
    %c0_i32 = arith.constant 0 : i32
    %c0_i32_0 = arith.constant 0 : i32
    %c0_i32_1 = arith.constant 0 : i32
    return %0, %c0_i32, %c0_i32_0 : i32, i32, i32
  }
  func.func @transform_9(%arg0: i32, %arg1: memref<1xi32, #tpu.memory_space<smem>>) -> (i32, i32, i32) {
    %c0 = arith.constant 0 : index
    %0 = memref.load %arg1[%c0] : memref<1xi32, #tpu.memory_space<smem>>
    %c0_i32 = arith.constant 0 : i32
    %c0_i32_0 = arith.constant 0 : i32
    %c0_i32_1 = arith.constant 0 : i32
    return %0, %c0_i32, %c0_i32_0 : i32, i32, i32
  }
  func.func @transform_10(%arg0: i32, %arg1: memref<1xi32, #tpu.memory_space<smem>>) -> (i32, i32, i32) {
    %c0 = arith.constant 0 : index
    %0 = memref.load %arg1[%c0] : memref<1xi32, #tpu.memory_space<smem>>
    %c0_i32 = arith.constant 0 : i32
    %c0_i32_0 = arith.constant 0 : i32
    %c0_i32_1 = arith.constant 0 : i32
    return %0, %c0_i32, %c0_i32_0 : i32, i32, i32
  }
  func.func @transform_11(%arg0: i32, %arg1: memref<1xi32, #tpu.memory_space<smem>>) -> (i32, i32) {
    %c0_i32 = arith.constant 0 : i32
    %c0_i32_0 = arith.constant 0 : i32
    return %arg0, %c0_i32 : i32, i32
  }
  func.func @transform_12(%arg0: i32, %arg1: memref<1xi32, #tpu.memory_space<smem>>) -> (i32, i32) {
    %c0_i32 = arith.constant 0 : i32
    %c0_i32_0 = arith.constant 0 : i32
    return %arg0, %c0_i32 : i32, i32
  }
  func.func @transform_13(%arg0: i32, %arg1: memref<1xi32, #tpu.memory_space<smem>>) -> (i32, i32) {
    %c0_i32 = arith.constant 0 : i32
    %c0_i32_0 = arith.constant 0 : i32
    return %arg0, %c0_i32 : i32, i32
  }
}

</mosaic_0001>

<llo_original>
// kernel: _fused_forward.1
$region0: #{_fused_forward.1}
  #allocation0 [shape = 'u32[]', space=smem, size = 0x4, offset = 0x4, fixed_abs, tag = 'smem constant byte address 0x4 - core index']
  #allocation1 [shape = 'u32[144,128]{1,0:T(1,128)}', space=vmem, size = 0x12000, scoped, tag = 'internal scratch']
  #allocation2 [shape = 's32[1]{0}', space=sflag, size = 0x4, scoped, tag = 'scoped memory for _fused_forward.1']
  #allocation3 [shape = 's32[1]{0:T(128)S(6)}', space=smem, size = 0x200, scoped, tag = 'prefetched SMEM operand 0']
  %s0 = inlined_call_operand.<no memory space> [shape: s32[1], index: 0, kind: input, shape index: {}]
  %s1 = inlined_call_operand.vmem [shape: f32[8,128], index: 1, kind: input, shape index: {}]
  %s2 = inlined_call_operand.hbm [shape: f32[128,128], index: 2, kind: input, shape index: {}]
  %s3 = inlined_call_operand.vmem [shape: f32[1,128], index: 3, kind: input, shape index: {}]
  %s4 = inlined_call_operand.hbm [shape: f32[3,128,128], index: 4, kind: input, shape index: {}]
  %s5 = inlined_call_operand.vmem [shape: f32[3,1,128], index: 5, kind: input, shape index: {}]
  %s6 = inlined_call_operand.hbm [shape: f32[3,128,128], index: 6, kind: input, shape index: {}]
  %s7 = inlined_call_operand.vmem [shape: f32[3,1,128], index: 7, kind: input, shape index: {}]
  %s8 = inlined_call_operand.hbm [shape: f32[3,128,128], index: 8, kind: input, shape index: {}]
  %s9 = inlined_call_operand.vmem [shape: f32[3,1,128], index: 9, kind: input, shape index: {}]
  %s10 = inlined_call_operand.hbm [shape: f32[3,128,128], index: 10, kind: input, shape index: {}]
  %s11 = inlined_call_operand.vmem [shape: f32[3,1,128], index: 11, kind: input, shape index: {}]
  %s12 = inlined_call_operand.hbm [shape: f32[8,128], index: 12, kind: output, shape index: {0}]
  %s13 = inlined_call_operand.hbm [shape: f32[8,128], index: 13, kind: output, shape index: {1}]
  %s14 = inlined_call_operand.hbm [shape: f32[8,128], index: 14, kind: output, shape index: {2}]
  %15 = xla_tuple %s12, %s13, %s14
  %s16 = sld [smem:[#allocation0]]
  $region90: #{_fused_forward.1} parent=0
    _
  %s18 = ssub.s32 1, %s16
  %s19 = scalar_select 0, %s18, %s16
  %20 = sst [smem:[#allocation3]] %s0
  $region1: #{_fused_forward.1} parent=0
    #allocation4 [shape = 'u8[65536]{0}', space=vmem, size = 0x10000, scoped, tag = 'input window, operand 2, single buffered']
    #allocation5 [shape = 's32[1]{0}', space=sflag, size = 0x4, scoped, tag = 'scoped memory for _fused_forward.1']
    #allocation6 [shape = 's32[1]{0}', space=sflag, size = 0x4, scoped, tag = 'scoped memory for _fused_forward.1']
    #allocation7 [shape = 'u8[65536]{0}', space=vmem, size = 0x10000, scoped, tag = 'input window, operand 4, single buffered']
    #allocation8 [shape = 's32[1]{0}', space=sflag, size = 0x4, scoped, tag = 'scoped memory for _fused_forward.1']
    #allocation9 [shape = 'u8[65536]{0}', space=vmem, size = 0x10000, scoped, tag = 'input window, operand 6, single buffered']
    #allocation10 [shape = 'u8[65536]{0}', space=vmem, size = 0x10000, scoped, tag = 'input window, operand 8, single buffered']
    #allocation11 [shape = 's32[1]{0}', space=sflag, size = 0x4, scoped, tag = 'scoped memory for _fused_forward.1']
    #allocation12 [shape = 'u8[65536]{0}', space=vmem, size = 0x10000, scoped, tag = 'input window, operand 10, single buffered']
    #allocation13 [shape = 'u8[4096]{0}', space=vmem, size = 0x1000, scoped, tag = 'output window, operand 0, single buffered']
    #allocation14 [shape = 'u8[4096]{0}', space=vmem, size = 0x1000, scoped, tag = 'output window, operand 1, single buffered']
    #allocation15 [shape = 's32[1]{0}', space=sflag, size = 0x4, scoped, tag = 'scoped memory for _fused_forward.1']
    #allocation16 [shape = 'u8[4096]{0}', space=vmem, size = 0x1000, scoped, tag = 'output window, operand 2, single buffered']
    %21 = vsyncpa [#allocation5], 0
    %22 = vsyncpa [#allocation8], 0
    %23 = vsyncpa [#allocation11], 0
    %24 = vsyncpa [#allocation6], 0
    %25 = vsyncpa [#allocation15], 0
    // Predicated region
    $region2: #{_fused_forward.1} parent=1 // pred_check
      _
    $region3: #{_fused_forward.1} parent=1 // pred_check_branch
      %27 = sbr.rel (0) target = $region5
    $region4: #{_fused_forward.1} parent=1 // pred_region
      _
    $region5: #{_fused_forward.1} parent=1 // pred_fallthru
      _
    // Predicated region
    $region6: #{_fused_forward.1} parent=1 // pred_check
      _
    $region7: #{_fused_forward.1} parent=1 // pred_check_branch
      %29 = sbr.rel (0) target = $region9
    $region8: #{_fused_forward.1} parent=1 // pred_region
      %s31 = ssub.s32 2048, 2048
      %32 = vsyncadd [#allocation5], %s31
      %s33 = sshll.u32 [#allocation4], 4
      %s34 = int_to_ptr.vmem [resolvable:$true] %s33
      %39 = dma.hbm_to_vmem [thread:$0]  %s2, 2048, %s34, [#allocation5], 128, 128, 8
    $region9: #{_fused_forward.1} parent=1 // pred_fallthru
      _
    // Predicated region
    $region10: #{_fused_forward.1} parent=1 // pred_check
      _
    $region11: #{_fused_forward.1} parent=1 // pred_check_branch
      %41 = sbr.rel (0) target = $region13
    $region12: #{_fused_forward.1} parent=1 // pred_region
      _
    $region13: #{_fused_forward.1} parent=1 // pred_fallthru
      _
    // Predicated region
    $region14: #{_fused_forward.1} parent=1 // pred_check
      _
    $region15: #{_fused_forward.1} parent=1 // pred_check_branch
      %43 = sbr.rel (0) target = $region17
    $region16: #{_fused_forward.1} parent=1 // pred_region
      %s44 = sld [smem:[#allocation3]]
      %s46 = ssub.s32 2048, 2048
      %47 = vsyncadd [#allocation8], %s46
      %s48 = smul.addr %s44, 16
      %s49 = smul.addr %s48, 128
      %s50 = scalar_lea.hbm %s4, %s49
      %s51 = sshll.u32 [#allocation7], 4
      %s52 = int_to_ptr.vmem [resolvable:$true] %s51
      %57 = dma.hbm_to_vmem [thread:$0]  %s50, 2048, %s52, [#allocation8], 128, 128, 8
    $region17: #{_fused_forward.1} parent=1 // pred_fallthru
      _
    // Predicated region
    $region18: #{_fused_forward.1} parent=1 // pred_check
      _
    $region19: #{_fused_forward.1} parent=1 // pred_check_branch
      %59 = sbr.rel (0) target = $region21
    $region20: #{_fused_forward.1} parent=1 // pred_region
      %s60 = sld [smem:[#allocation3]]
      %p61 = scmp.lt.s32.totalorder %s60, 2
      %s62 = scalar_select %p61, %s60, 2
      %s63 = scalar_lea.vmem %s5, %s62
      %s64 = sld [smem:[#allocation3]]
    $region21: #{_fused_forward.1} parent=1 // pred_fallthru
      _
    // Predicated region
    $region22: #{_fused_forward.1} parent=1 // pred_check
      _
    $region23: #{_fused_forward.1} parent=1 // pred_check_branch
      %66 = sbr.rel (0) target = $region25
    $region24: #{_fused_forward.1} parent=1 // pred_region
      %s67 = sld [smem:[#allocation3]]
      %s69 = ssub.s32 2048, 2048
      %70 = vsyncadd [#allocation8], %s69
      %s71 = smul.addr %s67, 16
      %s72 = smul.addr %s71, 128
      %s73 = scalar_lea.hbm %s6, %s72
      %s74 = sshll.u32 [#allocation9], 4
      %s75 = int_to_ptr.vmem [resolvable:$true] %s74
      %80 = dma.hbm_to_vmem [thread:$0]  %s73, 2048, %s75, [#allocation8], 128, 128, 8
    $region25: #{_fused_forward.1} parent=1 // pred_fallthru
      _
    // Predicated region
    $region26: #{_fused_forward.1} parent=1 // pred_check
      _
    $region27: #{_fused_forward.1} parent=1 // pred_check_branch
      %82 = sbr.rel (0) target = $region29
    $region28: #{_fused_forward.1} parent=1 // pred_region
      %s83 = sld [smem:[#allocation3]]
      %p84 = scmp.lt.s32.totalorder %s83, 2
      %s85 = scalar_select %p84, %s83, 2
      %s86 = scalar_lea.vmem %s7, %s85
      %s87 = sld [smem:[#allocation3]]
    $region29: #{_fused_forward.1} parent=1 // pred_fallthru
      _
    // Predicated region
    $region30: #{_fused_forward.1} parent=1 // pred_check
      _
    $region31: #{_fused_forward.1} parent=1 // pred_check_branch
      %89 = sbr.rel (0) target = $region33
    $region32: #{_fused_forward.1} parent=1 // pred_region
      %s90 = sld [smem:[#allocation3]]
      %s92 = ssub.s32 2048, 2048
      %93 = vsyncadd [#allocation11], %s92
      %s94 = smul.addr %s90, 16
      %s95 = smul.addr %s94, 128
      %s96 = scalar_lea.hbm %s8, %s95
      %s97 = sshll.u32 [#allocation10], 4
      %s98 = int_to_ptr.vmem [resolvable:$true] %s97
      %103 = dma.hbm_to_vmem [thread:$0]  %s96, 2048, %s98, [#allocation11], 128, 128, 8
    $region33: #{_fused_forward.1} parent=1 // pred_fallthru
      _
    // Predicated region
    $region34: #{_fused_forward.1} parent=1 // pred_check
      _
    $region35: #{_fused_forward.1} parent=1 // pred_check_branch
      %105 = sbr.rel (0) target = $region37
    $region36: #{_fused_forward.1} parent=1 // pred_region
      %s106 = sld [smem:[#allocation3]]
      %p107 = scmp.lt.s32.totalorder %s106, 2
      %s108 = scalar_select %p107, %s106, 2
      %s109 = scalar_lea.vmem %s9, %s108
      %s110 = sld [smem:[#allocation3]]
    $region37: #{_fused_forward.1} parent=1 // pred_fallthru
      _
    // Predicated region
    $region38: #{_fused_forward.1} parent=1 // pred_check
      _
    $region39: #{_fused_forward.1} parent=1 // pred_check_branch
      %112 = sbr.rel (0) target = $region41
    $region40: #{_fused_forward.1} parent=1 // pred_region
      %s113 = sld [smem:[#allocation3]]
      %s115 = ssub.s32 2048, 2048
      %116 = vsyncadd [#allocation11], %s115
      %s117 = smul.addr %s113, 16
      %s118 = smul.addr %s117, 128
      %s119 = scalar_lea.hbm %s10, %s118
      %s120 = sshll.u32 [#allocation12], 4
      %s121 = int_to_ptr.vmem [resolvable:$true] %s120
      %126 = dma.hbm_to_vmem [thread:$0]  %s119, 2048, %s121, [#allocation11], 128, 128, 8
    $region41: #{_fused_forward.1} parent=1 // pred_fallthru
      _
    // Predicated region
    $region42: #{_fused_forward.1} parent=1 // pred_check
      _
    $region43: #{_fused_forward.1} parent=1 // pred_check_branch
      %128 = sbr.rel (0) target = $region45
    $region44: #{_fused_forward.1} parent=1 // pred_region
      %s129 = sld [smem:[#allocation3]]
      %p130 = scmp.lt.s32.totalorder %s129, 2
      %s131 = scalar_select %p130, %s129, 2
      %s132 = scalar_lea.vmem %s11, %s131
      %s133 = sld [smem:[#allocation3]]
    $region45: #{_fused_forward.1} parent=1 // pred_fallthru
      _
    // Predicated region
    $region46: #{_fused_forward.1} parent=1 // pred_check
      _
    $region47: #{_fused_forward.1} parent=1 // pred_check_branch
      %135 = sbr.rel (0) target = $region49
    $region48: #{_fused_forward.1} parent=1 // pred_region
      %136 = dma.done [#allocation5], 2048
    $region49: #{_fused_forward.1} parent=1 // pred_fallthru
      _
    // Predicated region
    $region50: #{_fused_forward.1} parent=1 // pred_check
      _
    $region51: #{_fused_forward.1} parent=1 // pred_check_branch
      %138 = sbr.rel (0) target = $region53
    $region52: #{_fused_forward.1} parent=1 // pred_region
      %139 = dma.done [#allocation8], 2048
    $region53: #{_fused_forward.1} parent=1 // pred_fallthru
      _
    // Predicated region
    $region54: #{_fused_forward.1} parent=1 // pred_check
      _
    $region55: #{_fused_forward.1} parent=1 // pred_check_branch
      %141 = sbr.rel (0) target = $region57
    $region56: #{_fused_forward.1} parent=1 // pred_region
      %142 = dma.done [#allocation8], 2048
    $region57: #{_fused_forward.1} parent=1 // pred_fallthru
      _
    // Predicated region
    $region58: #{_fused_forward.1} parent=1 // pred_check
      _
    $region59: #{_fused_forward.1} parent=1 // pred_check_branch
      %144 = sbr.rel (0) target = $region61
    $region60: #{_fused_forward.1} parent=1 // pred_region
      %145 = dma.done [#allocation11], 2048
    $region61: #{_fused_forward.1} parent=1 // pred_fallthru
      _
    // Predicated region
    $region62: #{_fused_forward.1} parent=1 // pred_check
      _
    $region63: #{_fused_forward.1} parent=1 // pred_check_branch
      %147 = sbr.rel (0) target = $region65
    $region64: #{_fused_forward.1} parent=1 // pred_region
      %148 = dma.done [#allocation11], 2048
    $region65: #{_fused_forward.1} parent=1 // pred_fallthru
      _
    %s149 = sld [smem:[#allocation3]]
    %p150 = scmp.lt.s32.totalorder %s149, 2
    %s151 = scalar_select %p150, %s149, 2
    %s152 = scalar_lea.vmem %s5, %s151
    %s153 = sld [smem:[#allocation3]]
    %p154 = scmp.lt.s32.totalorder %s153, 2
    %s155 = scalar_select %p154, %s153, 2
    %s156 = scalar_lea.vmem %s7, %s155
    %s157 = sld [smem:[#allocation3]]
    %p158 = scmp.lt.s32.totalorder %s157, 2
    %s159 = scalar_select %p158, %s157, 2
    %s160 = scalar_lea.vmem %s9, %s159
    %s161 = sld [smem:[#allocation3]]
    %p162 = scmp.lt.s32.totalorder %s161, 2
    %s163 = scalar_select %p162, %s161, 2
    %s164 = scalar_lea.vmem %s11, %s163
    %s165 = sld [smem:[#allocation3]]
    %s166 = sld [smem:[#allocation3]]
    %p167 = scmp.lt.s32.totalorder %s166, 2
    %s168 = scalar_select %p167, %s166, 2
    %s169 = scalar_lea.vmem %s5, %s168
    %s170 = sld [smem:[#allocation3]]
    %s171 = sld [smem:[#allocation3]]
    %s172 = sld [smem:[#allocation3]]
    %p173 = scmp.lt.s32.totalorder %s172, 2
    %s174 = scalar_select %p173, %s172, 2
    %s175 = scalar_lea.vmem %s7, %s174
    %s176 = sld [smem:[#allocation3]]
    %s177 = sld [smem:[#allocation3]]
    %s178 = sld [smem:[#allocation3]]
    %p179 = scmp.lt.s32.totalorder %s178, 2
    %s180 = scalar_select %p179, %s178, 2
    %s181 = scalar_lea.vmem %s9, %s180
    %s182 = sld [smem:[#allocation3]]
    %s183 = sld [smem:[#allocation3]]
    %s184 = sld [smem:[#allocation3]]
    %p185 = scmp.lt.s32.totalorder %s184, 2
    %s186 = scalar_select %p185, %s184, 2
    %s187 = scalar_lea.vmem %s11, %s186
    %s188 = sld [smem:[#allocation3]]
    %v189 = vld [vmem:[%s3] sm:$0x1]
    %v190 = vld [vmem:[%s169] sm:$0x1]
    %v191 = vld [vmem:[%s175] sm:$0x1]
    %v192 = vld [vmem:[%s181] sm:$0x1]
    %v193 = vld [vmem:[%s187] sm:$0x1]
    %v194 = vld [vmem:[%s1] sm:$0xff]
    %v195 = vld [vmem:[#allocation4] sm:$0xff]
    %v196 = vld [vmem:[#allocation4 + $0x8] sm:$0xff]
    %v197 = vld [vmem:[#allocation4 + $0x10] sm:$0xff]
    %v198 = vld [vmem:[#allocation4 + $0x18] sm:$0xff]
    %v199 = vld [vmem:[#allocation4 + $0x20] sm:$0xff]
    %v200 = vld [vmem:[#allocation4 + $0x28] sm:$0xff]
    %v201 = vld [vmem:[#allocation4 + $0x30] sm:$0xff]
    %v202 = vld [vmem:[#allocation4 + $0x38] sm:$0xff]
    %v203 = vld [vmem:[#allocation4 + $0x40] sm:$0xff]
    %v204 = vld [vmem:[#allocation4 + $0x48] sm:$0xff]
    %v205 = vld [vmem:[#allocation4 + $0x50] sm:$0xff]
    %v206 = vld [vmem:[#allocation4 + $0x58] sm:$0xff]
    %v207 = vld [vmem:[#allocation4 + $0x60] sm:$0xff]
    %v208 = vld [vmem:[#allocation4 + $0x68] sm:$0xff]
    %v209 = vld [vmem:[#allocation4 + $0x70] sm:$0xff]
    %v210 = vld [vmem:[#allocation4 + $0x78] sm:$0xff]
    %v212 = vlaneseq
    %v213 = vshrl.u32 %v212, 7
    %v214 = vsub.s32 0, %v213
    %v215 = vrot.slane %v189, %v214
    %217 = vmatprep.subr.mxu0 0.0
    %218 = vmatpush1.msra.mxu0 %v195
    %219 = vmatprep.subr.mxu0 0.0
    %220 = vmatpush1.msra.mxu0 %v196
    %221 = vmatprep.subr.mxu0 0.0
    %222 = vmatpush1.msra.mxu0 %v197
    %223 = vmatprep.subr.mxu0 0.0
    %224 = vmatpush1.msra.mxu0 %v198
    %225 = vmatprep.subr.mxu0 0.0
    %226 = vmatpush1.msra.mxu0 %v199
    %227 = vmatprep.subr.mxu0 0.0
    %228 = vmatpush1.msra.mxu0 %v200
    %229 = vmatprep.subr.mxu0 0.0
    %230 = vmatpush1.msra.mxu0 %v201
    %231 = vmatprep.subr.mxu0 0.0
    %232 = vmatpush1.msra.mxu0 %v202
    %233 = vmatprep.subr.mxu0 0.0
    %234 = vmatpush1.msra.mxu0 %v203
    %235 = vmatprep.subr.mxu0 0.0
    %236 = vmatpush1.msra.mxu0 %v204
    %237 = vmatprep.subr.mxu0 0.0
    %238 = vmatpush1.msra.mxu0 %v205
    %239 = vmatprep.subr.mxu0 0.0
    %240 = vmatpush1.msra.mxu0 %v206
    %241 = vmatprep.subr.mxu0 0.0
    %242 = vmatpush1.msra.mxu0 %v207
    %243 = vmatprep.subr.mxu0 0.0
    %244 = vmatpush1.msra.mxu0 %v208
    %245 = vmatprep.subr.mxu0 0.0
    %246 = vmatpush1.msra.mxu0 %v209
    %247 = vmatprep.subr.mxu0 0.0
    %248 = vmatpush1.msra.mxu0 %v210
    %249 = vmatprep.subr.mxu0 0.0
    %250 = vmatpush1.msra.mxu0 0.0
    %251 = vmatprep.subr.mxu0 0.0
    %252 = vmatpush1.msra.mxu0 0.0
    %253 = vmatprep.subr.mxu0 0.0
    %254 = vmatpush1.msra.mxu0 0.0
    %255 = vmatprep.subr.mxu0 0.0
    %256 = vmatpush1.msra.mxu0 0.0
    %257 = vmatprep.subr.mxu0 0.0
    %258 = vmatpush1.msra.mxu0 0.0
    %259 = vmatprep.subr.mxu0 0.0
    %260 = vmatpush1.msra.mxu0 0.0
    %261 = vmatprep.subr.mxu0 0.0
    %262 = vmatpush1.msra.mxu0 0.0
    %263 = vmatprep.subr.mxu0 0.0
    %264 = vmatpush1.msra.mxu0 0.0
    %265 = vmatprep.subr.mxu0 0.0
    %266 = vmatpush1.msra.mxu0 0.0
    %267 = vmatprep.subr.mxu0 0.0
    %268 = vmatpush1.msra.mxu0 0.0
    %269 = vmatprep.subr.mxu0 0.0
    %270 = vmatpush1.msra.mxu0 0.0
    %271 = vmatprep.subr.mxu0 0.0
    %272 = vmatpush1.msra.mxu0 0.0
    %273 = vmatprep.subr.mxu0 0.0
    %274 = vmatpush1.msra.mxu0 0.0
    %275 = vmatprep.subr.mxu0 0.0
    %276 = vmatpush1.msra.mxu0 0.0
    %277 = vmatprep.subr.mxu0 0.0
    %278 = vmatpush1.msra.mxu0 0.0
    %279 = vmatprep.subr.mxu0 0.0
    %280 = vmatpush1.msra.mxu0 0.0
    %281 = vmatprep.mubr.f32.mxu0 0.0
    %282 = vmatmul.mubr.f32.gmra.mrb[0].mxu0 %v194
    %v283 = vpop.f32.mrb[0].mxu0
    %v284 = vadd.f32 %v215, %v283
    %v285 = vpop.f32.mrb[0].mxu0
    %286 = vdwg.mxu0
    %287 = vst [vmem:[#allocation14] sm:$0xff] %v284
    %v288 = vld [vmem:[#allocation7] sm:$0xff]
    %v289 = vld [vmem:[#allocation7 + $0x8] sm:$0xff]
    %v290 = vld [vmem:[#allocation7 + $0x10] sm:$0xff]
    %v291 = vld [vmem:[#allocation7 + $0x18] sm:$0xff]
    %v292 = vld [vmem:[#allocation7 + $0x20] sm:$0xff]
    %v293 = vld [vmem:[#allocation7 + $0x28] sm:$0xff]
    %v294 = vld [vmem:[#allocation7 + $0x30] sm:$0xff]
    %v295 = vld [vmem:[#allocation7 + $0x38] sm:$0xff]
    %v296 = vld [vmem:[#allocation7 + $0x40] sm:$0xff]
    %v297 = vld [vmem:[#allocation7 + $0x48] sm:$0xff]
    %v298 = vld [vmem:[#allocation7 + $0x50] sm:$0xff]
    %v299 = vld [vmem:[#allocation7 + $0x58] sm:$0xff]
    %v300 = vld [vmem:[#allocation7 + $0x60] sm:$0xff]
    %v301 = vld [vmem:[#allocation7 + $0x68] sm:$0xff]
    %v302 = vld [vmem:[#allocation7 + $0x70] sm:$0xff]
    %v303 = vld [vmem:[#allocation7 + $0x78] sm:$0xff]
    %v305 = vlaneseq
    %v306 = vshrl.u32 %v305, 7
    %v307 = vsub.s32 0, %v306
    %v308 = vrot.slane %v190, %v307
    %310 = vmatprep.subr.mxu0 0.0
    %311 = vmatpush1.msra.mxu0 %v288
    %312 = vmatprep.subr.mxu0 0.0
    %313 = vmatpush1.msra.mxu0 %v289
    %314 = vmatprep.subr.mxu0 0.0
    %315 = vmatpush1.msra.mxu0 %v290
    %316 = vmatprep.subr.mxu0 0.0
    %317 = vmatpush1.msra.mxu0 %v291
    %318 = vmatprep.subr.mxu0 0.0
    %319 = vmatpush1.msra.mxu0 %v292
    %320 = vmatprep.subr.mxu0 0.0
    %321 = vmatpush1.msra.mxu0 %v293
    %322 = vmatprep.subr.mxu0 0.0
    %323 = vmatpush1.msra.mxu0 %v294
    %324 = vmatprep.subr.mxu0 0.0
    %325 = vmatpush1.msra.mxu0 %v295
    %326 = vmatprep.subr.mxu0 0.0
    %327 = vmatpush1.msra.mxu0 %v296
    %328 = vmatprep.subr.mxu0 0.0
    %329 = vmatpush1.msra.mxu0 %v297
    %330 = vmatprep.subr.mxu0 0.0
    %331 = vmatpush1.msra.mxu0 %v298
    %332 = vmatprep.subr.mxu0 0.0
    %333 = vmatpush1.msra.mxu0 %v299
    %334 = vmatprep.subr.mxu0 0.0
    %335 = vmatpush1.msra.mxu0 %v300
    %336 = vmatprep.subr.mxu0 0.0
    %337 = vmatpush1.msra.mxu0 %v301
    %338 = vmatprep.subr.mxu0 0.0
    %339 = vmatpush1.msra.mxu0 %v302
    %340 = vmatprep.subr.mxu0 0.0
    %341 = vmatpush1.msra.mxu0 %v303
    %342 = vmatprep.subr.mxu0 0.0
    %343 = vmatpush1.msra.mxu0 0.0
    %344 = vmatprep.subr.mxu0 0.0
    %345 = vmatpush1.msra.mxu0 0.0
    %346 = vmatprep.subr.mxu0 0.0
    %347 = vmatpush1.msra.mxu0 0.0
    %348 = vmatprep.subr.mxu0 0.0
    %349 = vmatpush1.msra.mxu0 0.0
    %350 = vmatprep.subr.mxu0 0.0
    %351 = vmatpush1.msra.mxu0 0.0
    %352 = vmatprep.subr.mxu0 0.0
    %353 = vmatpush1.msra.mxu0 0.0
    %354 = vmatprep.subr.mxu0 0.0
    %355 = vmatpush1.msra.mxu0 0.0
    %356 = vmatprep.subr.mxu0 0.0
    %357 = vmatpush1.msra.mxu0 0.0
    %358 = vmatprep.subr.mxu0 0.0
    %359 = vmatpush1.msra.mxu0 0.0
    %360 = vmatprep.subr.mxu0 0.0
    %361 = vmatpush1.msra.mxu0 0.0
    %362 = vmatprep.subr.mxu0 0.0
    %363 = vmatpush1.msra.mxu0 0.0
    %364 = vmatprep.subr.mxu0 0.0
    %365 = vmatpush1.msra.mxu0 0.0
    %366 = vmatprep.subr.mxu0 0.0
    %367 = vmatpush1.msra.mxu0 0.0
    %368 = vmatprep.subr.mxu0 0.0
    %369 = vmatpush1.msra.mxu0 0.0
    %370 = vmatprep.subr.mxu0 0.0
    %371 = vmatpush1.msra.mxu0 0.0
    %372 = vmatprep.subr.mxu0 0.0
    %373 = vmatpush1.msra.mxu0 0.0
    %374 = vmatprep.mubr.f32.mxu0 0.0
    %375 = vmatmul.mubr.f32.gmra.mrb[0].mxu0 %v284
    %v376 = vpop.f32.mrb[0].mxu0
    %v377 = vadd.f32 %v308, %v376
    %v378 = vpop.f32.mrb[0].mxu0
    %379 = vdwg.mxu0
    %v380 = vxor.u32 %v377, 2147483648
    %v381 = vmul.f32 %v380, 1.442695
    %v382 = vpow.pop %v381
    %v383 = vadd.f32 %v382, 1.0
    %v384 = vrcp.pop %v383
    %v385 = vmul.f32 1.0, %v384
    %v386 = vmul.f32 %v377, %v385
    %v387 = vld [vmem:[#allocation9] sm:$0xff]
    %v388 = vld [vmem:[#allocation9 + $0x8] sm:$0xff]
    %v389 = vld [vmem:[#allocation9 + $0x10] sm:$0xff]
    %v390 = vld [vmem:[#allocation9 + $0x18] sm:$0xff]
    %v391 = vld [vmem:[#allocation9 + $0x20] sm:$0xff]
    %v392 = vld [vmem:[#allocation9 + $0x28] sm:$0xff]
    %v393 = vld [vmem:[#allocation9 + $0x30] sm:$0xff]
    %v394 = vld [vmem:[#allocation9 + $0x38] sm:$0xff]
    %v395 = vld [vmem:[#allocation9 + $0x40] sm:$0xff]
    %v396 = vld [vmem:[#allocation9 + $0x48] sm:$0xff]
    %v397 = vld [vmem:[#allocation9 + $0x50] sm:$0xff]
    %v398 = vld [vmem:[#allocation9 + $0x58] sm:$0xff]
    %v399 = vld [vmem:[#allocation9 + $0x60] sm:$0xff]
    %v400 = vld [vmem:[#allocation9 + $0x68] sm:$0xff]
    %v401 = vld [vmem:[#allocation9 + $0x70] sm:$0xff]
    %v402 = vld [vmem:[#allocation9 + $0x78] sm:$0xff]
    %v404 = vlaneseq
    %v405 = vshrl.u32 %v404, 7
    %v406 = vsub.s32 0, %v405
    %v407 = vrot.slane %v191, %v406
    %409 = vmatprep.subr.mxu0 0.0
    %410 = vmatpush1.msra.mxu0 %v387
    %411 = vmatprep.subr.mxu0 0.0
    %412 = vmatpush1.msra.mxu0 %v388
    %413 = vmatprep.subr.mxu0 0.0
    %414 = vmatpush1.msra.mxu0 %v389
    %415 = vmatprep.subr.mxu0 0.0
    %416 = vmatpush1.msra.mxu0 %v390
    %417 = vmatprep.subr.mxu0 0.0
    %418 = vmatpush1.msra.mxu0 %v391
    %419 = vmatprep.subr.mxu0 0.0
    %420 = vmatpush1.msra.mxu0 %v392
    %421 = vmatprep.subr.mxu0 0.0
    %422 = vmatpush1.msra.mxu0 %v393
    %423 = vmatprep.subr.mxu0 0.0
    %424 = vmatpush1.msra.mxu0 %v394
    %425 = vmatprep.subr.mxu0 0.0
    %426 = vmatpush1.msra.mxu0 %v395
    %427 = vmatprep.subr.mxu0 0.0
    %428 = vmatpush1.msra.mxu0 %v396
    %429 = vmatprep.subr.mxu0 0.0
    %430 = vmatpush1.msra.mxu0 %v397
    %431 = vmatprep.subr.mxu0 0.0
    %432 = vmatpush1.msra.mxu0 %v398
    %433 = vmatprep.subr.mxu0 0.0
    %434 = vmatpush1.msra.mxu0 %v399
    %435 = vmatprep.subr.mxu0 0.0
    %436 = vmatpush1.msra.mxu0 %v400
    %437 = vmatprep.subr.mxu0 0.0
    %438 = vmatpush1.msra.mxu0 %v401
    %439 = vmatprep.subr.mxu0 0.0
    %440 = vmatpush1.msra.mxu0 %v402
    %441 = vmatprep.subr.mxu0 0.0
    %442 = vmatpush1.msra.mxu0 0.0
    %443 = vmatprep.subr.mxu0 0.0
    %444 = vmatpush1.msra.mxu0 0.0
    %445 = vmatprep.subr.mxu0 0.0
    %446 = vmatpush1.msra.mxu0 0.0
    %447 = vmatprep.subr.mxu0 0.0
    %448 = vmatpush1.msra.mxu0 0.0
    %449 = vmatprep.subr.mxu0 0.0
    %450 = vmatpush1.msra.mxu0 0.0
    %451 = vmatprep.subr.mxu0 0.0
    %452 = vmatpush1.msra.mxu0 0.0
    %453 = vmatprep.subr.mxu0 0.0
    %454 = vmatpush1.msra.mxu0 0.0
    %455 = vmatprep.subr.mxu0 0.0
    %456 = vmatpush1.msra.mxu0 0.0
    %457 = vmatprep.subr.mxu0 0.0
    %458 = vmatpush1.msra.mxu0 0.0
    %459 = vmatprep.subr.mxu0 0.0
    %460 = vmatpush1.msra.mxu0 0.0
    %461 = vmatprep.subr.mxu0 0.0
    %462 = vmatpush1.msra.mxu0 0.0
    %463 = vmatprep.subr.mxu0 0.0
    %464 = vmatpush1.msra.mxu0 0.0
    %465 = vmatprep.subr.mxu0 0.0
    %466 = vmatpush1.msra.mxu0 0.0
    %467 = vmatprep.subr.mxu0 0.0
    %468 = vmatpush1.msra.mxu0 0.0
    %469 = vmatprep.subr.mxu0 0.0
    %470 = vmatpush1.msra.mxu0 0.0
    %471 = vmatprep.subr.mxu0 0.0
    %472 = vmatpush1.msra.mxu0 0.0
    %473 = vmatprep.mubr.f32.mxu0 0.0
    %474 = vmatmul.mubr.f32.gmra.mrb[0].mxu0 %v386
    %v475 = vpop.f32.mrb[0].mxu0
    %v476 = vadd.f32 %v407, %v475
    %v477 = vpop.f32.mrb[0].mxu0
    %478 = vdwg.mxu0
    %479 = vst [vmem:[#allocation13] sm:$0xff] %v476
    %v480 = vld [vmem:[#allocation10] sm:$0xff]
    %v481 = vld [vmem:[#allocation10 + $0x8] sm:$0xff]
    %v482 = vld [vmem:[#allocation10 + $0x10] sm:$0xff]
    %v483 = vld [vmem:[#allocation10 + $0x18] sm:$0xff]
    %v484 = vld [vmem:[#allocation10 + $0x20] sm:$0xff]
    %v485 = vld [vmem:[#allocation10 + $0x28] sm:$0xff]
    %v486 = vld [vmem:[#allocation10 + $0x30] sm:$0xff]
    %v487 = vld [vmem:[#allocation10 + $0x38] sm:$0xff]
    %v488 = vld [vmem:[#allocation10 + $0x40] sm:$0xff]
    %v489 = vld [vmem:[#allocation10 + $0x48] sm:$0xff]
    %v490 = vld [vmem:[#allocation10 + $0x50] sm:$0xff]
    %v491 = vld [vmem:[#allocation10 + $0x58] sm:$0xff]
    %v492 = vld [vmem:[#allocation10 + $0x60] sm:$0xff]
    %v493 = vld [vmem:[#allocation10 + $0x68] sm:$0xff]
    %v494 = vld [vmem:[#allocation10 + $0x70] sm:$0xff]
    %v495 = vld [vmem:[#allocation10 + $0x78] sm:$0xff]
    %v497 = vlaneseq
    %v498 = vshrl.u32 %v497, 7
    %v499 = vsub.s32 0, %v498
    %v500 = vrot.slane %v192, %v499
    %502 = vmatprep.subr.mxu0 0.0
    %503 = vmatpush1.msra.mxu0 %v480
    %504 = vmatprep.subr.mxu0 0.0
    %505 = vmatpush1.msra.mxu0 %v481
    %506 = vmatprep.subr.mxu0 0.0
    %507 = vmatpush1.msra.mxu0 %v482
    %508 = vmatprep.subr.mxu0 0.0
    %509 = vmatpush1.msra.mxu0 %v483
    %510 = vmatprep.subr.mxu0 0.0
    %511 = vmatpush1.msra.mxu0 %v484
    %512 = vmatprep.subr.mxu0 0.0
    %513 = vmatpush1.msra.mxu0 %v485
    %514 = vmatprep.subr.mxu0 0.0
    %515 = vmatpush1.msra.mxu0 %v486
    %516 = vmatprep.subr.mxu0 0.0
    %517 = vmatpush1.msra.mxu0 %v487
    %518 = vmatprep.subr.mxu0 0.0
    %519 = vmatpush1.msra.mxu0 %v488
    %520 = vmatprep.subr.mxu0 0.0
    %521 = vmatpush1.msra.mxu0 %v489
    %522 = vmatprep.subr.mxu0 0.0
    %523 = vmatpush1.msra.mxu0 %v490
    %524 = vmatprep.subr.mxu0 0.0
    %525 = vmatpush1.msra.mxu0 %v491
    %526 = vmatprep.subr.mxu0 0.0
    %527 = vmatpush1.msra.mxu0 %v492
    %528 = vmatprep.subr.mxu0 0.0
    %529 = vmatpush1.msra.mxu0 %v493
    %530 = vmatprep.subr.mxu0 0.0
    %531 = vmatpush1.msra.mxu0 %v494
    %532 = vmatprep.subr.mxu0 0.0
    %533 = vmatpush1.msra.mxu0 %v495
    %534 = vmatprep.subr.mxu0 0.0
    %535 = vmatpush1.msra.mxu0 0.0
    %536 = vmatprep.subr.mxu0 0.0
    %537 = vmatpush1.msra.mxu0 0.0
    %538 = vmatprep.subr.mxu0 0.0
    %539 = vmatpush1.msra.mxu0 0.0
    %540 = vmatprep.subr.mxu0 0.0
    %541 = vmatpush1.msra.mxu0 0.0
    %542 = vmatprep.subr.mxu0 0.0
    %543 = vmatpush1.msra.mxu0 0.0
    %544 = vmatprep.subr.mxu0 0.0
    %545 = vmatpush1.msra.mxu0 0.0
    %546 = vmatprep.subr.mxu0 0.0
    %547 = vmatpush1.msra.mxu0 0.0
    %548 = vmatprep.subr.mxu0 0.0
    %549 = vmatpush1.msra.mxu0 0.0
    %550 = vmatprep.subr.mxu0 0.0
    %551 = vmatpush1.msra.mxu0 0.0
    %552 = vmatprep.subr.mxu0 0.0
    %553 = vmatpush1.msra.mxu0 0.0
    %554 = vmatprep.subr.mxu0 0.0
    %555 = vmatpush1.msra.mxu0 0.0
    %556 = vmatprep.subr.mxu0 0.0
    %557 = vmatpush1.msra.mxu0 0.0
    %558 = vmatprep.subr.mxu0 0.0
    %559 = vmatpush1.msra.mxu0 0.0
    %560 = vmatprep.subr.mxu0 0.0
    %561 = vmatpush1.msra.mxu0 0.0
    %562 = vmatprep.subr.mxu0 0.0
    %563 = vmatpush1.msra.mxu0 0.0
    %564 = vmatprep.subr.mxu0 0.0
    %565 = vmatpush1.msra.mxu0 0.0
    %566 = vmatprep.mubr.f32.mxu0 0.0
    %567 = vmatmul.mubr.f32.gmra.mrb[0].mxu0 %v476
    %v568 = vpop.f32.mrb[0].mxu0
    %v569 = vadd.f32 %v500, %v568
    %v570 = vpop.f32.mrb[0].mxu0
    %571 = vdwg.mxu0
    %v572 = vxor.u32 %v569, 2147483648
    %v573 = vmul.f32 %v572, 1.442695
    %v574 = vpow.pop %v573
    %v575 = vadd.f32 %v574, 1.0
    %v576 = vrcp.pop %v575
    %v577 = vmul.f32 1.0, %v576
    %v578 = vmul.f32 %v569, %v577
    %v579 = vld [vmem:[#allocation12] sm:$0xff]
    %v580 = vld [vmem:[#allocation12 + $0x8] sm:$0xff]
    %v581 = vld [vmem:[#allocation12 + $0x10] sm:$0xff]
    %v582 = vld [vmem:[#allocation12 + $0x18] sm:$0xff]
    %v583 = vld [vmem:[#allocation12 + $0x20] sm:$0xff]
    %v584 = vld [vmem:[#allocation12 + $0x28] sm:$0xff]
    %v585 = vld [vmem:[#allocation12 + $0x30] sm:$0xff]
    %v586 = vld [vmem:[#allocation12 + $0x38] sm:$0xff]
    %v587 = vld [vmem:[#allocation12 + $0x40] sm:$0xff]
    %v588 = vld [vmem:[#allocation12 + $0x48] sm:$0xff]
    %v589 = vld [vmem:[#allocation12 + $0x50] sm:$0xff]
    %v590 = vld [vmem:[#allocation12 + $0x58] sm:$0xff]
    %v591 = vld [vmem:[#allocation12 + $0x60] sm:$0xff]
    %v592 = vld [vmem:[#allocation12 + $0x68] sm:$0xff]
    %v593 = vld [vmem:[#allocation12 + $0x70] sm:$0xff]
    %v594 = vld [vmem:[#allocation12 + $0x78] sm:$0xff]
    %v596 = vlaneseq
    %v597 = vshrl.u32 %v596, 7
    %v598 = vsub.s32 0, %v597
    %v599 = vrot.slane %v193, %v598
    %601 = vmatprep.subr.mxu0 0.0
    %602 = vmatpush1.msra.mxu0 %v579
    %603 = vmatprep.subr.mxu0 0.0
    %604 = vmatpush1.msra.mxu0 %v580
    %605 = vmatprep.subr.mxu0 0.0
    %606 = vmatpush1.msra.mxu0 %v581
    %607 = vmatprep.subr.mxu0 0.0
    %608 = vmatpush1.msra.mxu0 %v582
    %609 = vmatprep.subr.mxu0 0.0
    %610 = vmatpush1.msra.mxu0 %v583
    %611 = vmatprep.subr.mxu0 0.0
    %612 = vmatpush1.msra.mxu0 %v584
    %613 = vmatprep.subr.mxu0 0.0
    %614 = vmatpush1.msra.mxu0 %v585
    %615 = vmatprep.subr.mxu0 0.0
    %616 = vmatpush1.msra.mxu0 %v586
    %617 = vmatprep.subr.mxu0 0.0
    %618 = vmatpush1.msra.mxu0 %v587
    %619 = vmatprep.subr.mxu0 0.0
    %620 = vmatpush1.msra.mxu0 %v588
    %621 = vmatprep.subr.mxu0 0.0
    %622 = vmatpush1.msra.mxu0 %v589
    %623 = vmatprep.subr.mxu0 0.0
    %624 = vmatpush1.msra.mxu0 %v590
    %625 = vmatprep.subr.mxu0 0.0
    %626 = vmatpush1.msra.mxu0 %v591
    %627 = vmatprep.subr.mxu0 0.0
    %628 = vmatpush1.msra.mxu0 %v592
    %629 = vmatprep.subr.mxu0 0.0
    %630 = vmatpush1.msra.mxu0 %v593
    %631 = vmatprep.subr.mxu0 0.0
    %632 = vmatpush1.msra.mxu0 %v594
    %633 = vmatprep.subr.mxu0 0.0
    %634 = vmatpush1.msra.mxu0 0.0
    %635 = vmatprep.subr.mxu0 0.0
    %636 = vmatpush1.msra.mxu0 0.0
    %637 = vmatprep.subr.mxu0 0.0
    %638 = vmatpush1.msra.mxu0 0.0
    %639 = vmatprep.subr.mxu0 0.0
    %640 = vmatpush1.msra.mxu0 0.0
    %641 = vmatprep.subr.mxu0 0.0
    %642 = vmatpush1.msra.mxu0 0.0
    %643 = vmatprep.subr.mxu0 0.0
    %644 = vmatpush1.msra.mxu0 0.0
    %645 = vmatprep.subr.mxu0 0.0
    %646 = vmatpush1.msra.mxu0 0.0
    %647 = vmatprep.subr.mxu0 0.0
    %648 = vmatpush1.msra.mxu0 0.0
    %649 = vmatprep.subr.mxu0 0.0
    %650 = vmatpush1.msra.mxu0 0.0
    %651 = vmatprep.subr.mxu0 0.0
    %652 = vmatpush1.msra.mxu0 0.0
    %653 = vmatprep.subr.mxu0 0.0
    %654 = vmatpush1.msra.mxu0 0.0
    %655 = vmatprep.subr.mxu0 0.0
    %656 = vmatpush1.msra.mxu0 0.0
    %657 = vmatprep.subr.mxu0 0.0
    %658 = vmatpush1.msra.mxu0 0.0
    %659 = vmatprep.subr.mxu0 0.0
    %660 = vmatpush1.msra.mxu0 0.0
    %661 = vmatprep.subr.mxu0 0.0
    %662 = vmatpush1.msra.mxu0 0.0
    %663 = vmatprep.subr.mxu0 0.0
    %664 = vmatpush1.msra.mxu0 0.0
    %665 = vmatprep.mubr.f32.mxu0 0.0
    %666 = vmatmul.mubr.f32.gmra.mrb[0].mxu0 %v578
    %v667 = vpop.f32.mrb[0].mxu0
    %v668 = vadd.f32 %v599, %v667
    %v669 = vpop.f32.mrb[0].mxu0
    %670 = vdwg.mxu0
    %671 = vst [vmem:[#allocation16] sm:$0xff] %v668
    // Predicated region
    $region66: #{_fused_forward.1} parent=1 // pred_check
      _
    $region67: #{_fused_forward.1} parent=1 // pred_check_branch
      %673 = sbr.rel (0) target = $region69
    $region68: #{_fused_forward.1} parent=1 // pred_region
      %s675 = ssub.s32 128, 128
      %676 = vsyncadd [#allocation6], %s675
      %s678 = sshll.u32 [#allocation13], 4
      %s679 = int_to_ptr.vmem [resolvable:$true] %s678
      %681 = dma.vmem_to_hbm [thread:$0]  %s679, 128, %s12, [#allocation6]
    $region69: #{_fused_forward.1} parent=1 // pred_fallthru
      _
    // Predicated region
    $region70: #{_fused_forward.1} parent=1 // pred_check
      _
    $region71: #{_fused_forward.1} parent=1 // pred_check_branch
      %683 = sbr.rel (0) target = $region73
    $region72: #{_fused_forward.1} parent=1 // pred_region
      %s685 = ssub.s32 128, 128
      %686 = vsyncadd [#allocation15], %s685
      %s688 = sshll.u32 [#allocation14], 4
      %s689 = int_to_ptr.vmem [resolvable:$true] %s688
      %691 = dma.vmem_to_hbm [thread:$0]  %s689, 128, %s13, [#allocation15]
    $region73: #{_fused_forward.1} parent=1 // pred_fallthru
      _
    // Predicated region
    $region74: #{_fused_forward.1} parent=1 // pred_check
      _
    $region75: #{_fused_forward.1} parent=1 // pred_check_branch
      %693 = sbr.rel (0) target = $region77
    $region76: #{_fused_forward.1} parent=1 // pred_region
      %s695 = ssub.s32 128, 128
      %696 = vsyncadd [#allocation15], %s695
      %s698 = sshll.u32 [#allocation16], 4
      %s699 = int_to_ptr.vmem [resolvable:$true] %s698
      %701 = dma.vmem_to_hbm [thread:$0]  %s699, 128, %s14, [#allocation15]
    $region77: #{_fused_forward.1} parent=1 // pred_fallthru
      _
    // Predicated region
    $region78: #{_fused_forward.1} parent=1 // pred_check
      _
    $region79: #{_fused_forward.1} parent=1 // pred_check_branch
      %703 = sbr.rel (0) target = $region81
    $region80: #{_fused_forward.1} parent=1 // pred_region
      %704 = dma.done [#allocation6], 128
    $region81: #{_fused_forward.1} parent=1 // pred_fallthru
      _
    // Predicated region
    $region82: #{_fused_forward.1} parent=1 // pred_check
      _
    $region83: #{_fused_forward.1} parent=1 // pred_check_branch
      %706 = sbr.rel (0) target = $region85
    $region84: #{_fused_forward.1} parent=1 // pred_region
      %707 = dma.done [#allocation15], 128
    $region85: #{_fused_forward.1} parent=1 // pred_fallthru
      _
    // Predicated region
    $region86: #{_fused_forward.1} parent=1 // pred_check
      _
    $region87: #{_fused_forward.1} parent=1 // pred_check_branch
      %709 = sbr.rel (0) target = $region89
    $region88: #{_fused_forward.1} parent=1 // pred_region
      %710 = dma.done [#allocation15], 128
    $region89: #{_fused_forward.1} parent=1 // pred_fallthru
      _
    %711 = vsyncpa [#allocation5], 1
    %712 = vsyncpa [#allocation8], 1
    %713 = vsyncpa [#allocation11], 1
    %714 = vsyncpa [#allocation6], 1
    %715 = vsyncpa [#allocation15], 1

</llo_original>
